<compile_context>
chip_gen: v7x
topology: tpu7x:2x2x1
jax: 0.10.0
libtpu: 0.0.40
codegen_flags: <defaults>
</compile_context>

<pallas_src>
import functools

import jax
import jax.numpy as jnp
from jax.experimental import pallas as pl
from jax.experimental.pallas import tpu as pltpu


def _sememe_kernel(x_ref, emb_ref, out_ref, acc_ref, pad_ref, *,
                   pad_chunk, pad_col, num_chunks):
    # x_ref   : (tm, N)  int32  -- row tile of sememe indices
    # emb_ref : (tv, D)  f32    -- vocabulary chunk k of the embedding table
    # out_ref : (tm, D)  f32
    # acc_ref : (tm, D)  f32    -- persistent accumulator across vocab chunks
    # pad_ref : (tm, 1)  f32    -- padding-row count (set in chunk `pad_chunk`)
    k = pl.program_id(1)

    idx = x_ref[...]                                   # (tm, N)
    tm, n = idx.shape
    tv = emb_ref.shape[0]

    # Chunk-local histogram of indices: column c counts hits of vocab id
    # k*tv + c.  N is a small static constant, so this is a short VPU loop.
    vocab = jax.lax.broadcasted_iota(jnp.int32, (tm, tv), 1) + k * tv
    counts = jnp.zeros((tm, tv), dtype=jnp.float32)
    for j in range(n):
        col = idx[:, j:j + 1]                          # (tm, 1)
        counts = counts + (col == vocab).astype(jnp.float32)

    # Sum of looked-up embeddings for this vocab chunk == counts @ table_chunk.
    partial = jnp.dot(counts, emb_ref[...], preferred_element_type=jnp.float32)

    if num_chunks == 1:
        # Single vocab chunk: no accumulator round-trip needed at all.
        valid = float(n) - counts[:, pad_col:pad_col + 1]
        denom = jnp.maximum(valid, 1.0)
        out_ref[...] = partial * pl.reciprocal(denom, approx=True)
        return

    @pl.when(k == 0)
    def _init():
        acc_ref[...] = partial                          # store, not zero+add

    @pl.when(k > 0)
    def _accumulate():
        acc_ref[...] += partial

    # The padding-row count already sits in the histogram; grab it when we
    # process the chunk that contains the padding index.
    @pl.when(k == pad_chunk)
    def _grab_pad():
        pad_ref[...] = counts[:, pad_col:pad_col + 1]

    @pl.when(k == num_chunks - 1)
    def _finalize():
        valid = float(n) - pad_ref[...]                 # #non-padding per row
        denom = jnp.maximum(valid, 1.0)
        # EUP approximate reciprocal: keeps the divide off the VPU slots.
        out_ref[...] = acc_ref[...] * pl.reciprocal(denom, approx=True)


def _round_up(a, b):
    return (a + b - 1) // b * b


def sememe_embedding_forward(x, emb_table, *, tm=256, tv=512):
    """x: (B, S, N) int; emb_table: (V+1, D) f32 -> (B, S, D) f32."""
    B, S, N = x.shape
    V1, D = emb_table.shape
    V = V1 - 1                                   # padding index

    M = B * S
    # Row tile: default 256 (fills MXU rows on v6e/v7x), clamped for tiny M,
    # always a multiple of 8 sublanes; rows padded instead of asserting M % tm.
    tm_eff = _round_up(min(tm, _round_up(M, 8)), 8)
    Mp = _round_up(M, tm_eff)

    # Vocab chunk: multiple of 8, clamped for tiny vocabularies.
    tv_eff = _round_up(min(tv, _round_up(V1, 8)), 8)
    V1p = _round_up(V1, tv_eff)
    num_chunks = V1p // tv_eff

    pad_chunk = V // tv_eff                      # chunk holding the padding row
    pad_col = V % tv_eff

    x2 = x.reshape(M, N).astype(jnp.int32)
    if Mp != M:
        # Padded rows point at the (zero) padding embedding; they are sliced off.
        x2 = jnp.pad(x2, ((0, Mp - M), (0, 0)), constant_values=V)

    table = emb_table.astype(jnp.float32)
    if V1p != V1:
        table = jnp.pad(table, ((0, V1p - V1), (0, 0)))   # zero rows, never hit

    kernel = functools.partial(_sememe_kernel, pad_chunk=pad_chunk,
                               pad_col=pad_col, num_chunks=num_chunks)

    out = pl.pallas_call(
        kernel,
        out_shape=jax.ShapeDtypeStruct((Mp, D), jnp.float32),
        grid_spec=pltpu.PrefetchScalarGridSpec(
            num_scalar_prefetch=0,
            grid=(Mp // tm_eff, num_chunks),         # reduction (vocab) axis last
            in_specs=[
                # Index tile: constant across k -> fetched once per row tile.
                pl.BlockSpec((tm_eff, N), lambda i, k: (i, 0)),
                # Table chunk: only a (tv, D) window is double-buffered, never
                # the full table.
                pl.BlockSpec((tv_eff, D), lambda i, k: (k, 0)),
            ],
            out_specs=pl.BlockSpec((tm_eff, D), lambda i, k: (i, 0)),
            scratch_shapes=[
                pltpu.VMEM((tm_eff, D), jnp.float32),   # accumulator
                pltpu.VMEM((tm_eff, 1), jnp.float32),   # padding count per row
            ],
        ),
        compiler_params=pltpu.CompilerParams(
            dimension_semantics=("parallel", "arbitrary"),
            # Explicit, conservative budget: fits v5e/v6e (128 MiB) and the
            # v7x 64 MiB ceiling with headroom; actual use is far below this.
            vmem_limit_bytes=32 * 1024 * 1024,
        ),
    )(x2, table)

    return out[:M].reshape(B, S, D)


def make_embedding_table(key, sememe_number, embedding_dim, max_norm=5.0):
    """Deterministic init mirroring nn.Embedding(V+1, D, padding_idx=V, max_norm=5)."""
    w = jax.random.normal(key, (sememe_number + 1, embedding_dim), jnp.float32)
    w = w.at[sememe_number].set(0.0)                 # padding row zeroed
    norms = jnp.sqrt(jnp.sum(w * w, axis=1, keepdims=True))
    scale = jnp.minimum(1.0, max_norm / jnp.maximum(norms, 1e-7))
    return w * scale


def _reference(x, emb_table, sememe_number):
    x_mask = (x < sememe_number).astype(jnp.float32)           # (B, S, N)
    x_emb = emb_table[x]                                       # (B, S, N, D)
    num = jnp.sum(x_emb, axis=2)                               # (B, S, D)
    den = jnp.maximum(jnp.sum(x_mask, axis=2, keepdims=True), 1.0)
    return num / den


if __name__ == "__main__":
    sememe_number = 64
    embedding_dim = 32
    B, S, N = 2, 8, 8

    key = jax.random.PRNGKey(0)
    k_emb, k_idx = jax.random.split(key)

    emb_table = make_embedding_table(k_emb, sememe_number, embedding_dim)
    # indices in [0, sememe_number]; value == sememe_number acts as padding
    x = jax.random.randint(k_idx, (B, S, N), 0, sememe_number + 1,
                           dtype=jnp.int32)

    ref = _reference(x, emb_table, sememe_number)

    # Default (large-tile) configuration: single vocab chunk -> fast path.
    out = jax.block_until_ready(sememe_embedding_forward(x, emb_table))
    assert out.shape == (B, S, embedding_dim)
    # Tolerance accounts for the EUP approximate reciprocal in normalization.
    assert jnp.allclose(out, ref, atol=2e-3, rtol=2e-3)

    # Small-tile configuration: forces multiple row tiles AND multiple vocab
    # chunks, exercising the accumulator / padding-count reduction path.
    out2 = jax.block_until_ready(sememe_embedding_forward(x, emb_table,
                                                          tm=8, tv=16))
    assert jnp.allclose(out2, ref, atol=2e-3, rtol=2e-3)

    print("KERNEL_OK")
</pallas_src>

<mosaic_0001>
module attributes {stable_mosaic.version = 11 : i64} {
  func.func @_sememe_kernel(%arg0: i32, %arg1: i32, %arg2: memref<16x8xi32, #tpu.memory_space<vmem>>, %arg3: memref<72x32xf32, #tpu.memory_space<vmem>>, %arg4: memref<16x32xf32, #tpu.memory_space<vmem>>, %arg5: memref<16x32xf32, #tpu.memory_space<vmem>>, %arg6: memref<16x1xf32, #tpu.memory_space<vmem>>) attributes {dimension_semantics = [#tpu.dimension_semantics<parallel>, #tpu.dimension_semantics<arbitrary>], iteration_bounds = array<i64: 1, 1>, scalar_prefetch = 0 : i64, scratch_operands = 2 : i64, tpu.core_type = #tpu.core_type<tc>, window_params = [{transform_indices = @transform_0, window_bounds = array<i64: 16, 8>}, {transform_indices = @transform_1, window_bounds = array<i64: 72, 32>}, {transform_indices = @transform_2, window_bounds = array<i64: 16, 32>}]} {
    %c0 = arith.constant 0 : index
    %c0_0 = arith.constant 0 : index
    %0 = vector.load %arg2[%c0, %c0_0] : memref<16x8xi32, #tpu.memory_space<vmem>>, vector<16x8xi32>
    %1 = tpu.iota {dimensions = array<i32: 1>} : vector<16x72xi32>
    %c72_i32 = arith.constant 72 : i32
    %2 = arith.muli %arg1, %c72_i32 : i32
    %3 = vector.broadcast %2 : i32 to vector<16x72xi32>
    %4 = arith.addi %1, %3 : vector<16x72xi32>
    %cst = arith.constant 0.000000e+00 : f32
    %5 = vector.broadcast %cst : f32 to vector<16x72xf32>
    %6 = vector.extract_strided_slice %0 {offsets = [0, 0], sizes = [16, 1], strides = [1, 1]} : vector<16x8xi32> to vector<16x1xi32>
    %7 = vector.broadcast %6 : vector<16x1xi32> to vector<16x72xi32>
    %8 = arith.cmpi eq, %7, %4 : vector<16x72xi32>
    %9 = arith.extui %8 : vector<16x72xi1> to vector<16x72xi32>
    %10 = arith.sitofp %9 : vector<16x72xi32> to vector<16x72xf32>
    %11 = arith.addf %5, %10 : vector<16x72xf32>
    %12 = vector.extract_strided_slice %0 {offsets = [0, 1], sizes = [16, 1], strides = [1, 1]} : vector<16x8xi32> to vector<16x1xi32>
    %13 = vector.broadcast %12 : vector<16x1xi32> to vector<16x72xi32>
    %14 = arith.cmpi eq, %13, %4 : vector<16x72xi32>
    %15 = arith.extui %14 : vector<16x72xi1> to vector<16x72xi32>
    %16 = arith.sitofp %15 : vector<16x72xi32> to vector<16x72xf32>
    %17 = arith.addf %11, %16 : vector<16x72xf32>
    %18 = vector.extract_strided_slice %0 {offsets = [0, 2], sizes = [16, 1], strides = [1, 1]} : vector<16x8xi32> to vector<16x1xi32>
    %19 = vector.broadcast %18 : vector<16x1xi32> to vector<16x72xi32>
    %20 = arith.cmpi eq, %19, %4 : vector<16x72xi32>
    %21 = arith.extui %20 : vector<16x72xi1> to vector<16x72xi32>
    %22 = arith.sitofp %21 : vector<16x72xi32> to vector<16x72xf32>
    %23 = arith.addf %17, %22 : vector<16x72xf32>
    %24 = vector.extract_strided_slice %0 {offsets = [0, 3], sizes = [16, 1], strides = [1, 1]} : vector<16x8xi32> to vector<16x1xi32>
    %25 = vector.broadcast %24 : vector<16x1xi32> to vector<16x72xi32>
    %26 = arith.cmpi eq, %25, %4 : vector<16x72xi32>
    %27 = arith.extui %26 : vector<16x72xi1> to vector<16x72xi32>
    %28 = arith.sitofp %27 : vector<16x72xi32> to vector<16x72xf32>
    %29 = arith.addf %23, %28 : vector<16x72xf32>
    %30 = vector.extract_strided_slice %0 {offsets = [0, 4], sizes = [16, 1], strides = [1, 1]} : vector<16x8xi32> to vector<16x1xi32>
    %31 = vector.broadcast %30 : vector<16x1xi32> to vector<16x72xi32>
    %32 = arith.cmpi eq, %31, %4 : vector<16x72xi32>
    %33 = arith.extui %32 : vector<16x72xi1> to vector<16x72xi32>
    %34 = arith.sitofp %33 : vector<16x72xi32> to vector<16x72xf32>
    %35 = arith.addf %29, %34 : vector<16x72xf32>
    %36 = vector.extract_strided_slice %0 {offsets = [0, 5], sizes = [16, 1], strides = [1, 1]} : vector<16x8xi32> to vector<16x1xi32>
    %37 = vector.broadcast %36 : vector<16x1xi32> to vector<16x72xi32>
    %38 = arith.cmpi eq, %37, %4 : vector<16x72xi32>
    %39 = arith.extui %38 : vector<16x72xi1> to vector<16x72xi32>
    %40 = arith.sitofp %39 : vector<16x72xi32> to vector<16x72xf32>
    %41 = arith.addf %35, %40 : vector<16x72xf32>
    %42 = vector.extract_strided_slice %0 {offsets = [0, 6], sizes = [16, 1], strides = [1, 1]} : vector<16x8xi32> to vector<16x1xi32>
    %43 = vector.broadcast %42 : vector<16x1xi32> to vector<16x72xi32>
    %44 = arith.cmpi eq, %43, %4 : vector<16x72xi32>
    %45 = arith.extui %44 : vector<16x72xi1> to vector<16x72xi32>
    %46 = arith.sitofp %45 : vector<16x72xi32> to vector<16x72xf32>
    %47 = arith.addf %41, %46 : vector<16x72xf32>
    %48 = vector.extract_strided_slice %0 {offsets = [0, 7], sizes = [16, 1], strides = [1, 1]} : vector<16x8xi32> to vector<16x1xi32>
    %49 = vector.broadcast %48 : vector<16x1xi32> to vector<16x72xi32>
    %50 = arith.cmpi eq, %49, %4 : vector<16x72xi32>
    %51 = arith.extui %50 : vector<16x72xi1> to vector<16x72xi32>
    %52 = arith.sitofp %51 : vector<16x72xi32> to vector<16x72xf32>
    %53 = arith.addf %47, %52 : vector<16x72xf32>
    %c0_1 = arith.constant 0 : index
    %c0_2 = arith.constant 0 : index
    %54 = vector.load %arg3[%c0_1, %c0_2] : memref<72x32xf32, #tpu.memory_space<vmem>>, vector<72x32xf32>
    %cst_3 = arith.constant dense<0.000000e+00> : vector<16x32xf32>
    %55 = tpu.matmul %53, %54, %cst_3 {dimension_numbers = #tpu.dot_dimension_numbers<[1], [0], [0], [1], [0, 0, 1, 1], [], []>} : vector<16x72xf32>, vector<72x32xf32>, vector<16x32xf32> -> vector<16x32xf32>
    %56 = vector.extract_strided_slice %53 {offsets = [0, 64], sizes = [16, 1], strides = [1, 1]} : vector<16x72xf32> to vector<16x1xf32>
    %cst_4 = arith.constant 8.000000e+00 : f32
    %57 = vector.broadcast %cst_4 : f32 to vector<16x1xf32>
    %58 = arith.subf %57, %56 : vector<16x1xf32>
    %cst_5 = arith.constant 1.000000e+00 : f32
    %59 = vector.broadcast %cst_5 : f32 to vector<16x1xf32>
    %60 = arith.maximumf %58, %59 : vector<16x1xf32>
    %61 = tpu.reciprocal %60 {approx = true} : vector<16x1xf32> -> vector<16x1xf32>
    %62 = vector.broadcast %61 : vector<16x1xf32> to vector<16x32xf32>
    %63 = arith.mulf %55, %62 : vector<16x32xf32>
    %c0_6 = arith.constant 0 : index
    %c0_7 = arith.constant 0 : index
    %64 = vector.load %arg4[%c0_6, %c0_7] : memref<16x32xf32, #tpu.memory_space<vmem>>, vector<16x32xf32>
    tpu.vector_store %arg4[%c0_6, %c0_7], %63 {strides = array<i32>} : memref<16x32xf32, #tpu.memory_space<vmem>>, vector<16x32xf32>,
    return
  }
  func.func @transform_0(%arg0: i32, %arg1: i32) -> (i32, i32) {
    %c0_i32 = arith.constant 0 : i32
    %c0_i32_0 = arith.constant 0 : i32
    return %arg0, %c0_i32 : i32, i32
  }
  func.func @transform_1(%arg0: i32, %arg1: i32) -> (i32, i32) {
    %c0_i32 = arith.constant 0 : i32
    %c0_i32_0 = arith.constant 0 : i32
    return %arg1, %c0_i32 : i32, i32
  }
  func.func @transform_2(%arg0: i32, %arg1: i32) -> (i32, i32) {
    %c0_i32 = arith.constant 0 : i32
    %c0_i32_0 = arith.constant 0 : i32
    return %arg0, %c0_i32 : i32, i32
  }
}

</mosaic_0001>

<llo_original>
// kernel: tpu_custom_call.1
$region0: #{tpu_custom_call.1}
  #allocation0 [shape = 'u32[]', space=smem, size = 0x4, offset = 0x4, fixed_abs, tag = 'smem constant byte address 0x4 - core index']
  #allocation1 [shape = 'u32[144,128]{1,0:T(1,128)}', space=vmem, size = 0x12000, scoped, tag = 'internal scratch']
  #allocation2 [shape = 'f32[16,32]{1,0:T(8,128)}', space=vmem, size = 0x2000, scoped, tag = 'scratch operand']
  #allocation3 [shape = 'f32[16,1]{1,0:T(8,128)}', space=vmem, size = 0x2000, scoped, tag = 'scratch operand']
  %s0 = inlined_call_operand.vmem [shape: s32[16,8], index: 0, kind: input, shape index: {}]
  %s1 = inlined_call_operand.vmem [shape: f32[72,32], index: 1, kind: input, shape index: {}]
  %s2 = inlined_call_operand.hbm [shape: f32[16,32], index: 2, kind: output, shape index: {}]
  %s3 = sld [smem:[#allocation0]]
  $region18: #{tpu_custom_call.1} parent=0
    _
  %s5 = ssub.s32 1, %s3
  %s6 = scalar_select 0, %s5, %s3
  $region1: #{tpu_custom_call.1} parent=0
    #allocation4 [shape = 'u8[8192]{0}', space=vmem, size = 0x2000, scoped, tag = 'output window, operand 0, single buffered']
    #allocation5 [shape = 's32[1]{0}', space=sflag, size = 0x4, scoped, tag = 'scoped memory for tpu_custom_call.1']
    %7 = vsyncpa [#allocation5], 0
    // Predicated region
    $region2: #{tpu_custom_call.1} parent=1 // pred_check
      _
    $region3: #{tpu_custom_call.1} parent=1 // pred_check_branch
      %9 = sbr.rel (0) target = $region5
    $region4: #{tpu_custom_call.1} parent=1 // pred_region
      _
    $region5: #{tpu_custom_call.1} parent=1 // pred_fallthru
      _
    // Predicated region
    $region6: #{tpu_custom_call.1} parent=1 // pred_check
      _
    $region7: #{tpu_custom_call.1} parent=1 // pred_check_branch
      %11 = sbr.rel (0) target = $region9
    $region8: #{tpu_custom_call.1} parent=1 // pred_region
      _
    $region9: #{tpu_custom_call.1} parent=1 // pred_fallthru
      _
    %v12 = vld [vmem:[%s0] sm:$0xff]
    %v13 = vld [vmem:[%s0 + $0x8] sm:$0xff]
    %v14 = vlaneseq
    %v15 = vand.u32 %v14, 127
    %s16 = smul.u32 0, 72
    %v17 = vstv %s16
    %v18 = vadd.s32 %v15, %v17
    %19 = vset.pattern.permute.xlu0 0
    %20 = vperm.xlu0 %19, %v12
    %v21 = vpop.permute.xlu0 %20
    %22 = vset.pattern.permute.xlu0 0
    %23 = vperm.xlu0 %22, %v13
    %v24 = vpop.permute.xlu0 %23
    %vm25 = vcmp.eq.s32.totalorder %v21, %v18
    %vm26 = vcmp.eq.s32.totalorder %v24, %v18
    %v27 = vsel %vm25, 1, 0
    %v28 = vsel %vm26, 1, 0
    %v29 = vcvt.s32.f32 %v27
    %v30 = vcvt.s32.f32 %v28
    %v31 = vadd.f32 %v29, 0.0
    %v32 = vadd.f32 %v30, 0.0
    %33 = vset.pattern.permute.xlu0 1
    %34 = vperm.xlu0 %33, %v12
    %v35 = vpop.permute.xlu0 %34
    %36 = vset.pattern.permute.xlu0 1
    %37 = vperm.xlu0 %36, %v13
    %v38 = vpop.permute.xlu0 %37
    %vm39 = vcmp.eq.s32.totalorder %v35, %v18
    %vm40 = vcmp.eq.s32.totalorder %v38, %v18
    %v41 = vsel %vm39, 1, 0
    %v42 = vsel %vm40, 1, 0
    %v43 = vcvt.s32.f32 %v41
    %v44 = vcvt.s32.f32 %v42
    %v45 = vadd.f32 %v31, %v43
    %v46 = vadd.f32 %v32, %v44
    %47 = vset.pattern.permute.xlu0 2
    %48 = vperm.xlu0 %47, %v12
    %v49 = vpop.permute.xlu0 %48
    %50 = vset.pattern.permute.xlu0 2
    %51 = vperm.xlu0 %50, %v13
    %v52 = vpop.permute.xlu0 %51
    %vm53 = vcmp.eq.s32.totalorder %v49, %v18
    %vm54 = vcmp.eq.s32.totalorder %v52, %v18
    %v55 = vsel %vm53, 1, 0
    %v56 = vsel %vm54, 1, 0
    %v57 = vcvt.s32.f32 %v55
    %v58 = vcvt.s32.f32 %v56
    %v59 = vadd.f32 %v45, %v57
    %v60 = vadd.f32 %v46, %v58
    %61 = vset.pattern.permute.xlu0 3
    %62 = vperm.xlu0 %61, %v12
    %v63 = vpop.permute.xlu0 %62
    %64 = vset.pattern.permute.xlu0 3
    %65 = vperm.xlu0 %64, %v13
    %v66 = vpop.permute.xlu0 %65
    %vm67 = vcmp.eq.s32.totalorder %v63, %v18
    %vm68 = vcmp.eq.s32.totalorder %v66, %v18
    %v69 = vsel %vm67, 1, 0
    %v70 = vsel %vm68, 1, 0
    %v71 = vcvt.s32.f32 %v69
    %v72 = vcvt.s32.f32 %v70
    %v73 = vadd.f32 %v59, %v71
    %v74 = vadd.f32 %v60, %v72
    %75 = vset.pattern.permute.xlu0 4
    %76 = vperm.xlu0 %75, %v12
    %v77 = vpop.permute.xlu0 %76
    %78 = vset.pattern.permute.xlu0 4
    %79 = vperm.xlu0 %78, %v13
    %v80 = vpop.permute.xlu0 %79
    %vm81 = vcmp.eq.s32.totalorder %v77, %v18
    %vm82 = vcmp.eq.s32.totalorder %v80, %v18
    %v83 = vsel %vm81, 1, 0
    %v84 = vsel %vm82, 1, 0
    %v85 = vcvt.s32.f32 %v83
    %v86 = vcvt.s32.f32 %v84
    %v87 = vadd.f32 %v73, %v85
    %v88 = vadd.f32 %v74, %v86
    %89 = vset.pattern.permute.xlu0 5
    %90 = vperm.xlu0 %89, %v12
    %v91 = vpop.permute.xlu0 %90
    %92 = vset.pattern.permute.xlu0 5
    %93 = vperm.xlu0 %92, %v13
    %v94 = vpop.permute.xlu0 %93
    %vm95 = vcmp.eq.s32.totalorder %v91, %v18
    %vm96 = vcmp.eq.s32.totalorder %v94, %v18
    %v97 = vsel %vm95, 1, 0
    %v98 = vsel %vm96, 1, 0
    %v99 = vcvt.s32.f32 %v97
    %v100 = vcvt.s32.f32 %v98
    %v101 = vadd.f32 %v87, %v99
    %v102 = vadd.f32 %v88, %v100
    %103 = vset.pattern.permute.xlu0 6
    %104 = vperm.xlu0 %103, %v12
    %v105 = vpop.permute.xlu0 %104
    %106 = vset.pattern.permute.xlu0 6
    %107 = vperm.xlu0 %106, %v13
    %v108 = vpop.permute.xlu0 %107
    %vm109 = vcmp.eq.s32.totalorder %v105, %v18
    %vm110 = vcmp.eq.s32.totalorder %v108, %v18
    %v111 = vsel %vm109, 1, 0
    %v112 = vsel %vm110, 1, 0
    %v113 = vcvt.s32.f32 %v111
    %v114 = vcvt.s32.f32 %v112
    %v115 = vadd.f32 %v101, %v113
    %v116 = vadd.f32 %v102, %v114
    %117 = vset.pattern.permute.xlu0 7
    %118 = vperm.xlu0 %117, %v12
    %v119 = vpop.permute.xlu0 %118
    %120 = vset.pattern.permute.xlu0 7
    %121 = vperm.xlu0 %120, %v13
    %v122 = vpop.permute.xlu0 %121
    %vm123 = vcmp.eq.s32.totalorder %v119, %v18
    %vm124 = vcmp.eq.s32.totalorder %v122, %v18
    %v125 = vsel %vm123, 1, 0
    %v126 = vsel %vm124, 1, 0
    %v127 = vcvt.s32.f32 %v125
    %v128 = vcvt.s32.f32 %v126
    %v129 = vadd.f32 %v115, %v127
    %v130 = vadd.f32 %v116, %v128
    %v131 = vld [vmem:[%s1] sm:$0xff]
    %v132 = vld [vmem:[%s1 + $0x8] sm:$0xff]
    %v133 = vld [vmem:[%s1 + $0x10] sm:$0xff]
    %v134 = vld [vmem:[%s1 + $0x18] sm:$0xff]
    %v135 = vld [vmem:[%s1 + $0x20] sm:$0xff]
    %v136 = vld [vmem:[%s1 + $0x28] sm:$0xff]
    %v137 = vld [vmem:[%s1 + $0x30] sm:$0xff]
    %v138 = vld [vmem:[%s1 + $0x38] sm:$0xff]
    %v139 = vld [vmem:[%s1 + $0x40] sm:$0xff]
    %vm140 = vcmask 588800
    %v142 = vsel %vm140, %v129, 0
    %v145 = vsel %vm140, %v130, 0
    %147 = vmatprep.subr.mxu0 0.0
    %148 = vmatpush1.msra.mxu0 %v131
    %149 = vmatprep.subr.mxu0 0.0
    %150 = vmatpush1.msra.mxu0 %v132
    %151 = vmatprep.subr.mxu0 0.0
    %152 = vmatpush1.msra.mxu0 %v133
    %153 = vmatprep.subr.mxu0 0.0
    %154 = vmatpush1.msra.mxu0 %v134
    %155 = vmatprep.subr.mxu0 0.0
    %156 = vmatpush1.msra.mxu0 %v135
    %157 = vmatprep.subr.mxu0 0.0
    %158 = vmatpush1.msra.mxu0 %v136
    %159 = vmatprep.subr.mxu0 0.0
    %160 = vmatpush1.msra.mxu0 %v137
    %161 = vmatprep.subr.mxu0 0.0
    %162 = vmatpush1.msra.mxu0 %v138
    %163 = vmatprep.subr.mxu0 0.0
    %164 = vmatpush1.msra.mxu0 %v139
    %165 = vmatprep.subr.mxu0 0.0
    %166 = vmatpush1.msra.mxu0 0.0
    %167 = vmatprep.subr.mxu0 0.0
    %168 = vmatpush1.msra.mxu0 0.0
    %169 = vmatprep.subr.mxu0 0.0
    %170 = vmatpush1.msra.mxu0 0.0
    %171 = vmatprep.subr.mxu0 0.0
    %172 = vmatpush1.msra.mxu0 0.0
    %173 = vmatprep.subr.mxu0 0.0
    %174 = vmatpush1.msra.mxu0 0.0
    %175 = vmatprep.subr.mxu0 0.0
    %176 = vmatpush1.msra.mxu0 0.0
    %177 = vmatprep.subr.mxu0 0.0
    %178 = vmatpush1.msra.mxu0 0.0
    %179 = vmatprep.subr.mxu0 0.0
    %180 = vmatpush1.msra.mxu0 0.0
    %181 = vmatprep.subr.mxu0 0.0
    %182 = vmatpush1.msra.mxu0 0.0
    %183 = vmatprep.subr.mxu0 0.0
    %184 = vmatpush1.msra.mxu0 0.0
    %185 = vmatprep.subr.mxu0 0.0
    %186 = vmatpush1.msra.mxu0 0.0
    %187 = vmatprep.subr.mxu0 0.0
    %188 = vmatpush1.msra.mxu0 0.0
    %189 = vmatprep.subr.mxu0 0.0
    %190 = vmatpush1.msra.mxu0 0.0
    %191 = vmatprep.subr.mxu0 0.0
    %192 = vmatpush1.msra.mxu0 0.0
    %193 = vmatprep.subr.mxu0 0.0
    %194 = vmatpush1.msra.mxu0 0.0
    %195 = vmatprep.subr.mxu0 0.0
    %196 = vmatpush1.msra.mxu0 0.0
    %197 = vmatprep.subr.mxu0 0.0
    %198 = vmatpush1.msra.mxu0 0.0
    %199 = vmatprep.subr.mxu0 0.0
    %200 = vmatpush1.msra.mxu0 0.0
    %201 = vmatprep.subr.mxu0 0.0
    %202 = vmatpush1.msra.mxu0 0.0
    %203 = vmatprep.subr.mxu0 0.0
    %204 = vmatpush1.msra.mxu0 0.0
    %205 = vmatprep.subr.mxu0 0.0
    %206 = vmatpush1.msra.mxu0 0.0
    %207 = vmatprep.subr.mxu0 0.0
    %208 = vmatpush1.msra.mxu0 0.0
    %209 = vmatprep.subr.mxu0 0.0
    %210 = vmatpush1.msra.mxu0 0.0
    %211 = vmatprep.mubr.f32.mxu0 0.0
    %212 = vmatmul.mubr.f32.gmra.mrb[0].mxu0 %v142
    %v213 = vpop.f32.mrb[0].mxu0
    %v214 = vadd.f32 0.0, %v213
    %v215 = vpop.f32.mrb[0].mxu0
    %216 = vmatprep.mubr.f32.mxu0 0.0
    %217 = vmatmul.mubr.f32.gmra.mrb[0].mxu0 %v145
    %v218 = vpop.f32.mrb[0].mxu0
    %v219 = vadd.f32 0.0, %v218
    %v220 = vpop.f32.mrb[0].mxu0
    %221 = vdwg.mxu0
    %v222 = vsub.f32 8.0, %v129
    %v223 = vsub.f32 8.0, %v130
    %v224 = vmax.f32 %v222, 1.0
    %v225 = vmax.f32 %v223, 1.0
    %v226 = vrcp.pop %v224
    %v227 = vrcp.pop %v225
    %229 = vset.pattern.permute.xlu0 64
    %230 = vperm.xlu0 %229, %v226
    %v231 = vpop.permute.xlu0 %230
    %234 = vset.pattern.permute.xlu0 64
    %235 = vperm.xlu0 %234, %v227
    %v236 = vpop.permute.xlu0 %235
    %v238 = vmul.f32 %v214, %v231
    %v239 = vmul.f32 %v219, %v236
    %vm240 = vcmask 261120
    %241 = vst.msk [vmem:[#allocation4] sm:$0xff] %vm240, %v238
    %242 = vst.msk [vmem:[#allocation4 + $0x8] sm:$0xff] %vm240, %v239
    // Predicated region
    $region10: #{tpu_custom_call.1} parent=1 // pred_check
      _
    $region11: #{tpu_custom_call.1} parent=1 // pred_check_branch
      %244 = sbr.rel (0) target = $region13
    $region12: #{tpu_custom_call.1} parent=1 // pred_region
      %s246 = ssub.s32 256, 256
      %247 = vsyncadd [#allocation5], %s246
      %s248 = sshll.u32 [#allocation4], 4
      %s249 = int_to_ptr.vmem [resolvable:$true] %s248
      %254 = dma.vmem_to_hbm [thread:$0]  %s249, 256, %s2, [#allocation5], 128, 128, 8
    $region13: #{tpu_custom_call.1} parent=1 // pred_fallthru
      _
    // Predicated region
    $region14: #{tpu_custom_call.1} parent=1 // pred_check
      _
    $region15: #{tpu_custom_call.1} parent=1 // pred_check_branch
      %256 = sbr.rel (0) target = $region17
    $region16: #{tpu_custom_call.1} parent=1 // pred_region
      %257 = dma.done [#allocation5], 256
    $region17: #{tpu_custom_call.1} parent=1 // pred_fallthru
      _
    %258 = vsyncpa [#allocation5], 1

</llo_original>
